<compile_context>
chip_gen: v6e
topology: v6e:2x2x1
jax: 0.10.0
libtpu: 0.0.40
codegen_flags: <defaults>
</compile_context>

<pallas_src>
import jax
import jax.numpy as jnp
from jax.experimental import pallas as pl
from jax.experimental.pallas import tpu as pltpu


def _round_up(x: int, m: int) -> int:
    return ((x + m - 1) // m) * m


def _critic_kernel(s_ref, a_ref, w1s_ref, w1a_ref, b1_ref, w2_ref, b2_ref,
                   wq_ref, bq_ref, out_ref):
    # s: (TB, Ds)   a: (TB, Da)
    # w1s: (Ds, H)  w1a: (Da, H)  b1: (1, H)
    # w2:  (H, H)   b2: (1, H)
    # wq:  (1, H)   bq: (1, 1) scalar in SMEM
    # out: (1, TB)  -- lane-dense (batch on the lane axis)
    h1 = (jnp.dot(s_ref[...], w1s_ref[...], preferred_element_type=jnp.float32)
          + jnp.dot(a_ref[...], w1a_ref[...], preferred_element_type=jnp.float32)
          + b1_ref[...])
    h1 = jnp.maximum(h1, 0.0)
    h2 = jnp.dot(h1, w2_ref[...], preferred_element_type=jnp.float32) + b2_ref[...]
    h2 = jnp.maximum(h2, 0.0)
    # Final layer: contract wq (1, H) with h2 (TB, H) on H  ==  wq @ h2^T,
    # producing the q values directly as a lane-dense (1, TB) row.
    q = jax.lax.dot_general(wq_ref[...], h2,
                            dimension_numbers=(((1,), (1,)), ((), ())),
                            preferred_element_type=jnp.float32)
    out_ref[...] = (q + bq_ref[0, 0]).astype(out_ref.dtype)


@jax.jit
def critic_forward(state, action, params):
    """Fused critic forward pass: one Pallas kernel over a batch-tiled grid."""
    w1, b1, w2, b2, wq, bq = params
    B, state_dim = state.shape
    action_dim = action.shape[1]
    H = w1.shape[1]

    # Split fc1's weight at trace time so the concat happens inside the kernel.
    w1_s = w1[:state_dim, :]
    w1_a = w1[state_dim:, :]
    wq_row = wq.reshape(1, H)            # (H, 1) -> (1, H)

    # Batch tile: multiple of 8 sublanes, capped at 256 rows.
    TB = min(256, _round_up(B, 8))
    B_pad = _round_up(B, TB)
    G = B_pad // TB
    if B_pad != B:
        pad = B_pad - B
        state = jnp.pad(state, ((0, pad), (0, 0)))
        action = jnp.pad(action, ((0, pad), (0, 0)))

    in_dim = state_dim + action_dim
    flops = 2 * B_pad * (in_dim * H + H * H + H)
    bytes_accessed = 4 * (B_pad * (in_dim + 1) + in_dim * H + H * H + 3 * H + 1)

    const2d = lambda shape: pl.BlockSpec(shape, lambda i: (0, 0))

    out = pl.pallas_call(
        _critic_kernel,
        out_shape=jax.ShapeDtypeStruct((G, 1, TB), jnp.float32),
        grid=(G,),
        in_specs=[
            pl.BlockSpec((TB, state_dim), lambda i: (i, 0)),   # state tile
            pl.BlockSpec((TB, action_dim), lambda i: (i, 0)),  # action tile
            const2d((state_dim, H)),                           # W1_s (resident)
            const2d((action_dim, H)),                          # W1_a (resident)
            const2d((1, H)),                                   # b1
            const2d((H, H)),                                   # W2
            const2d((1, H)),                                   # b2
            const2d((1, H)),                                   # wq row
            pl.BlockSpec(memory_space=pltpu.MemorySpace.SMEM),  # bq scalar
        ],
        out_specs=pl.BlockSpec((None, 1, TB), lambda i: (i, 0, 0)),
        compiler_params=pltpu.CompilerParams(
            dimension_semantics=("parallel",)),
        cost_estimate=pl.CostEstimate(flops=int(flops), transcendentals=0,
                                      bytes_accessed=int(bytes_accessed)),
    )(state, action, w1_s, w1_a, b1, w2, b2, wq_row, bq)

    q = out.reshape(B_pad, 1)
    if B_pad != B:
        q = q[:B]
    return q


def init_critic_params(key, state_dim, action_dim, hidden_dim=32):
    """Deterministic synthetic parameters matching nn.Linear shapes.

    Weights are stored already transposed to (in_features, out_features).
    """
    in_dim = state_dim + action_dim
    k1, k2, k3, k4, k5, k6 = jax.random.split(key, 6)

    def lin(kw, kb, fan_in, fan_out):
        bound = 1.0 / jnp.sqrt(jnp.float32(fan_in))
        w = jax.random.uniform(kw, (fan_in, fan_out), jnp.float32, -bound, bound)
        b = jax.random.uniform(kb, (1, fan_out), jnp.float32, -bound, bound)
        return w, b

    w1, b1 = lin(k1, k2, in_dim, hidden_dim)
    w2, b2 = lin(k3, k4, hidden_dim, hidden_dim)
    wq, bq = lin(k5, k6, hidden_dim, 1)
    return (w1, b1, w2, b2, wq, bq)


def critic_reference(state, action, params):
    """Pure-JAX reference for correctness checking (mirrors the PyTorch module)."""
    w1, b1, w2, b2, wq, bq = params
    x = jnp.concatenate([state, action], axis=1)
    h1 = jnp.maximum(x @ w1 + b1, 0.0)
    h2 = jnp.maximum(h1 @ w2 + b2, 0.0)
    return h2 @ wq + bq


if __name__ == "__main__":
    key = jax.random.PRNGKey(0)
    k_state, k_action, k_params = jax.random.split(key, 3)

    batch = 8
    state_dim = 12
    action_dim = 4
    hidden_dim = 32

    state = jax.random.normal(k_state, (batch, state_dim), dtype=jnp.float32)
    action = jax.random.normal(k_action, (batch, action_dim), dtype=jnp.float32)
    params = init_critic_params(k_params, state_dim, action_dim, hidden_dim)

    q = critic_forward(state, action, params)
    q = jax.block_until_ready(q)

    q_ref = critic_reference(state, action, params)
    assert q.shape == (batch, 1), q.shape
    assert jnp.allclose(q, q_ref, atol=1e-4, rtol=1e-4), (q, q_ref)

    print("KERNEL_OK")
</pallas_src>

<mosaic_0001>
module attributes {stable_mosaic.version = 11 : i64} {
  func.func @_critic_kernel(%arg0: i32, %arg1: memref<8x12xf32, #tpu.memory_space<vmem>>, %arg2: memref<8x4xf32, #tpu.memory_space<vmem>>, %arg3: memref<12x32xf32, #tpu.memory_space<vmem>>, %arg4: memref<4x32xf32, #tpu.memory_space<vmem>>, %arg5: memref<1x32xf32, #tpu.memory_space<vmem>>, %arg6: memref<32x32xf32, #tpu.memory_space<vmem>>, %arg7: memref<1x32xf32, #tpu.memory_space<vmem>>, %arg8: memref<1x32xf32, #tpu.memory_space<vmem>>, %arg9: memref<1x1xf32, #tpu.memory_space<smem>>, %arg10: memref<1x1x8xf32, #tpu.memory_space<vmem>>) attributes {dimension_semantics = [#tpu.dimension_semantics<parallel>], iteration_bounds = array<i64: 1>, scalar_prefetch = 0 : i64, scratch_operands = 0 : i64, tpu.core_type = #tpu.core_type<tc>, window_params = [{transform_indices = @transform_0, window_bounds = array<i64: 8, 12>}, {transform_indices = @transform_1, window_bounds = array<i64: 8, 4>}, {pipeline_mode = #tpu.pipeline_mode<synchronous>, transform_indices = @transform_2, window_bounds = array<i64: 12, 32>}, {pipeline_mode = #tpu.pipeline_mode<synchronous>, transform_indices = @transform_3, window_bounds = array<i64: 4, 32>}, {pipeline_mode = #tpu.pipeline_mode<synchronous>, transform_indices = @transform_4, window_bounds = array<i64: 1, 32>}, {pipeline_mode = #tpu.pipeline_mode<synchronous>, transform_indices = @transform_5, window_bounds = array<i64: 32, 32>}, {pipeline_mode = #tpu.pipeline_mode<synchronous>, transform_indices = @transform_6, window_bounds = array<i64: 1, 32>}, {pipeline_mode = #tpu.pipeline_mode<synchronous>, transform_indices = @transform_7, window_bounds = array<i64: 1, 32>}, {transform_indices = @transform_8, window_bounds = array<i64: 1, 1>}, {transform_indices = @transform_9, window_bounds = array<i64: 1, 1, 8>}]} {
    %c0 = arith.constant 0 : index
    %c0_0 = arith.constant 0 : index
    %0 = vector.load %arg1[%c0, %c0_0] : memref<8x12xf32, #tpu.memory_space<vmem>>, vector<8x12xf32>
    %c0_1 = arith.constant 0 : index
    %c0_2 = arith.constant 0 : index
    %1 = vector.load %arg3[%c0_1, %c0_2] : memref<12x32xf32, #tpu.memory_space<vmem>>, vector<12x32xf32>
    %cst = arith.constant dense<0.000000e+00> : vector<8x32xf32>
    %2 = tpu.matmul %0, %1, %cst {dimension_numbers = #tpu.dot_dimension_numbers<[1], [0], [0], [1], [0, 0, 1, 1], [], []>} : vector<8x12xf32>, vector<12x32xf32>, vector<8x32xf32> -> vector<8x32xf32>
    %c0_3 = arith.constant 0 : index
    %c0_4 = arith.constant 0 : index
    %3 = vector.load %arg2[%c0_3, %c0_4] : memref<8x4xf32, #tpu.memory_space<vmem>>, vector<8x4xf32>
    %c0_5 = arith.constant 0 : index
    %c0_6 = arith.constant 0 : index
    %4 = vector.load %arg4[%c0_5, %c0_6] : memref<4x32xf32, #tpu.memory_space<vmem>>, vector<4x32xf32>
    %cst_7 = arith.constant dense<0.000000e+00> : vector<8x32xf32>
    %5 = tpu.matmul %3, %4, %cst_7 {dimension_numbers = #tpu.dot_dimension_numbers<[1], [0], [0], [1], [0, 0, 1, 1], [], []>} : vector<8x4xf32>, vector<4x32xf32>, vector<8x32xf32> -> vector<8x32xf32>
    %6 = arith.addf %2, %5 : vector<8x32xf32>
    %c0_8 = arith.constant 0 : index
    %c0_9 = arith.constant 0 : index
    %7 = vector.load %arg5[%c0_8, %c0_9] : memref<1x32xf32, #tpu.memory_space<vmem>>, vector<1x32xf32>
    %8 = vector.broadcast %7 : vector<1x32xf32> to vector<8x32xf32>
    %9 = arith.addf %6, %8 : vector<8x32xf32>
    %cst_10 = arith.constant 0.000000e+00 : f32
    %10 = vector.broadcast %cst_10 : f32 to vector<8x32xf32>
    %11 = arith.maximumf %9, %10 : vector<8x32xf32>
    %c0_11 = arith.constant 0 : index
    %c0_12 = arith.constant 0 : index
    %12 = vector.load %arg6[%c0_11, %c0_12] : memref<32x32xf32, #tpu.memory_space<vmem>>, vector<32x32xf32>
    %cst_13 = arith.constant dense<0.000000e+00> : vector<8x32xf32>
    %13 = tpu.matmul %11, %12, %cst_13 {dimension_numbers = #tpu.dot_dimension_numbers<[1], [0], [0], [1], [0, 0, 1, 1], [], []>} : vector<8x32xf32>, vector<32x32xf32>, vector<8x32xf32> -> vector<8x32xf32>
    %c0_14 = arith.constant 0 : index
    %c0_15 = arith.constant 0 : index
    %14 = vector.load %arg7[%c0_14, %c0_15] : memref<1x32xf32, #tpu.memory_space<vmem>>, vector<1x32xf32>
    %15 = vector.broadcast %14 : vector<1x32xf32> to vector<8x32xf32>
    %16 = arith.addf %13, %15 : vector<8x32xf32>
    %cst_16 = arith.constant 0.000000e+00 : f32
    %17 = vector.broadcast %cst_16 : f32 to vector<8x32xf32>
    %18 = arith.maximumf %16, %17 : vector<8x32xf32>
    %c0_17 = arith.constant 0 : index
    %c0_18 = arith.constant 0 : index
    %19 = vector.load %arg8[%c0_17, %c0_18] : memref<1x32xf32, #tpu.memory_space<vmem>>, vector<1x32xf32>
    %cst_19 = arith.constant dense<0.000000e+00> : vector<1x8xf32>
    %20 = tpu.matmul %19, %18, %cst_19 {dimension_numbers = #tpu.dot_dimension_numbers<[1], [1], [0], [0], [0, 0, 1, 0], [], []>} : vector<1x32xf32>, vector<8x32xf32>, vector<1x8xf32> -> vector<1x8xf32>
    %c0_20 = arith.constant 0 : index
    %c0_21 = arith.constant 0 : index
    %21 = memref.load %arg9[%c0_20, %c0_21] : memref<1x1xf32, #tpu.memory_space<smem>>
    %22 = vector.broadcast %21 : f32 to vector<1x8xf32>
    %23 = arith.addf %20, %22 : vector<1x8xf32>
    %c0_22 = arith.constant 0 : index
    %c0_23 = arith.constant 0 : index
    %c0_24 = arith.constant 0 : index
    %24 = vector.load %arg10[%c0_22, %c0_23, %c0_24] : memref<1x1x8xf32, #tpu.memory_space<vmem>>, vector<1x1x8xf32>
    %25 = vector.shape_cast %24 : vector<1x1x8xf32> to vector<1x8xf32>
    %26 = vector.shape_cast %23 : vector<1x8xf32> to vector<1x1x8xf32>
    tpu.vector_store %arg10[%c0_22, %c0_23, %c0_24], %26 {strides = array<i32>} : memref<1x1x8xf32, #tpu.memory_space<vmem>>, vector<1x1x8xf32>,
    return
  }
  func.func @transform_0(%arg0: i32) -> (i32, i32) {
    %c0_i32 = arith.constant 0 : i32
    %c0_i32_0 = arith.constant 0 : i32
    return %arg0, %c0_i32 : i32, i32
  }
  func.func @transform_1(%arg0: i32) -> (i32, i32) {
    %c0_i32 = arith.constant 0 : i32
    %c0_i32_0 = arith.constant 0 : i32
    return %arg0, %c0_i32 : i32, i32
  }
  func.func @transform_2(%arg0: i32) -> (i32, i32) {
    %c0_i32 = arith.constant 0 : i32
    %c0_i32_0 = arith.constant 0 : i32
    %c0_i32_1 = arith.constant 0 : i32
    return %c0_i32, %c0_i32_0 : i32, i32
  }
  func.func @transform_3(%arg0: i32) -> (i32, i32) {
    %c0_i32 = arith.constant 0 : i32
    %c0_i32_0 = arith.constant 0 : i32
    %c0_i32_1 = arith.constant 0 : i32
    return %c0_i32, %c0_i32_0 : i32, i32
  }
  func.func @transform_4(%arg0: i32) -> (i32, i32) {
    %c0_i32 = arith.constant 0 : i32
    %c0_i32_0 = arith.constant 0 : i32
    %c0_i32_1 = arith.constant 0 : i32
    return %c0_i32, %c0_i32_0 : i32, i32
  }
  func.func @transform_5(%arg0: i32) -> (i32, i32) {
    %c0_i32 = arith.constant 0 : i32
    %c0_i32_0 = arith.constant 0 : i32
    %c0_i32_1 = arith.constant 0 : i32
    return %c0_i32, %c0_i32_0 : i32, i32
  }
  func.func @transform_6(%arg0: i32) -> (i32, i32) {
    %c0_i32 = arith.constant 0 : i32
    %c0_i32_0 = arith.constant 0 : i32
    %c0_i32_1 = arith.constant 0 : i32
    return %c0_i32, %c0_i32_0 : i32, i32
  }
  func.func @transform_7(%arg0: i32) -> (i32, i32) {
    %c0_i32 = arith.constant 0 : i32
    %c0_i32_0 = arith.constant 0 : i32
    %c0_i32_1 = arith.constant 0 : i32
    return %c0_i32, %c0_i32_0 : i32, i32
  }
  func.func @transform_8(%arg0: i32) -> (i32, i32) {
    %c0_i32 = arith.constant 0 : i32
    %c0_i32_0 = arith.constant 0 : i32
    %c0_i32_1 = arith.constant 0 : i32
    return %c0_i32, %c0_i32_0 : i32, i32
  }
  func.func @transform_9(%arg0: i32) -> (i32, i32, i32) {
    %c0_i32 = arith.constant 0 : i32
    %c0_i32_0 = arith.constant 0 : i32
    %c0_i32_1 = arith.constant 0 : i32
    return %arg0, %c0_i32, %c0_i32_0 : i32, i32, i32
  }
}

</mosaic_0001>

<llo_original>
// kernel: critic_forward.1
$region0: #{critic_forward.1}
  #allocation0 [shape = 'u32[]', space=smem, size = 0x4, offset = 0x4, fixed_abs, tag = 'smem constant byte address 0x4 - core index']
  #allocation1 [shape = 'u32[144,128]{1,0:T(1,128)}', space=vmem, size = 0x12000, scoped, tag = 'internal scratch']
  #allocation2 [shape = 'f32[1,1]{1,0:T(1,128)S(6)}', space=smem, size = 0x200, scoped, tag = 'scoped memory for critic_forward.1']
  %s0 = inlined_call_operand.vmem [shape: f32[8,12], index: 0, kind: input, shape index: {}]
  %s1 = inlined_call_operand.vmem [shape: f32[8,4], index: 1, kind: input, shape index: {}]
  %s2 = inlined_call_operand.vmem [shape: f32[12,32], index: 2, kind: input, shape index: {}]
  %s3 = inlined_call_operand.vmem [shape: f32[4,32], index: 3, kind: input, shape index: {}]
  %s4 = inlined_call_operand.vmem [shape: f32[1,32], index: 4, kind: input, shape index: {}]
  %s5 = inlined_call_operand.hbm [shape: f32[32,32], index: 5, kind: input, shape index: {}]
  %s6 = inlined_call_operand.vmem [shape: f32[1,32], index: 6, kind: input, shape index: {}]
  %s7 = inlined_call_operand.vmem [shape: f32[1,32], index: 7, kind: input, shape index: {}]
  %s8 = inlined_call_operand.<no memory space> [shape: f32[1,1], index: 8, kind: input, shape index: {}]
  %s9 = inlined_call_operand.hbm [shape: f32[1,1,8], index: 9, kind: output, shape index: {}]
  %s10 = sld [smem:[#allocation0]]
  $region50: #{critic_forward.1} parent=0
    _
  %s12 = ssub.s32 1, %s10
  %s13 = scalar_select 0, %s12, %s10
  %14 = sst [smem:[#allocation2]] %s8
  $region1: #{critic_forward.1} parent=0
    #allocation3 [shape = 'u8[16384]{0}', space=vmem, size = 0x4000, scoped, tag = 'input window, operand 5, single buffered']
    #allocation4 [shape = 's32[1]{0}', space=sflag, size = 0x4, scoped, tag = 'scoped memory for critic_forward.1']
    #allocation5 [shape = 's32[1]{0}', space=sflag, size = 0x4, scoped, tag = 'scoped memory for critic_forward.1']
    #allocation6 [shape = 'u8[512]{0}', space=vmem, size = 0x400, scoped, tag = 'output window, operand 0, single buffered']
    %15 = vsyncpa [#allocation4], 0
    %16 = vsyncpa [#allocation5], 0
    // Predicated region
    $region2: #{critic_forward.1} parent=1 // pred_check
      _
    $region3: #{critic_forward.1} parent=1 // pred_check_branch
      %18 = sbr.rel (0) target = $region5
    $region4: #{critic_forward.1} parent=1 // pred_region
      _
    $region5: #{critic_forward.1} parent=1 // pred_fallthru
      _
    // Predicated region
    $region6: #{critic_forward.1} parent=1 // pred_check
      _
    $region7: #{critic_forward.1} parent=1 // pred_check_branch
      %20 = sbr.rel (0) target = $region9
    $region8: #{critic_forward.1} parent=1 // pred_region
      _
    $region9: #{critic_forward.1} parent=1 // pred_fallthru
      _
    // Predicated region
    $region10: #{critic_forward.1} parent=1 // pred_check
      _
    $region11: #{critic_forward.1} parent=1 // pred_check_branch
      %22 = sbr.rel (0) target = $region13
    $region12: #{critic_forward.1} parent=1 // pred_region
      _
    $region13: #{critic_forward.1} parent=1 // pred_fallthru
      _
    // Predicated region
    $region14: #{critic_forward.1} parent=1 // pred_check
      _
    $region15: #{critic_forward.1} parent=1 // pred_check_branch
      %24 = sbr.rel (0) target = $region17
    $region16: #{critic_forward.1} parent=1 // pred_region
      _
    $region17: #{critic_forward.1} parent=1 // pred_fallthru
      _
    // Predicated region
    $region18: #{critic_forward.1} parent=1 // pred_check
      _
    $region19: #{critic_forward.1} parent=1 // pred_check_branch
      %26 = sbr.rel (0) target = $region21
    $region20: #{critic_forward.1} parent=1 // pred_region
      _
    $region21: #{critic_forward.1} parent=1 // pred_fallthru
      _
    // Predicated region
    $region22: #{critic_forward.1} parent=1 // pred_check
      _
    $region23: #{critic_forward.1} parent=1 // pred_check_branch
      %28 = sbr.rel (0) target = $region25
    $region24: #{critic_forward.1} parent=1 // pred_region
      %s30 = ssub.s32 512, 512
      %31 = vsyncadd [#allocation4], %s30
      %s32 = sshll.u32 [#allocation3], 4
      %s33 = int_to_ptr.vmem [resolvable:$true] %s32
      %38 = dma.hbm_to_vmem [thread:$0]  %s5, 512, %s33, [#allocation4], 128, 128, 8
    $region25: #{critic_forward.1} parent=1 // pred_fallthru
      _
    // Predicated region
    $region26: #{critic_forward.1} parent=1 // pred_check
      _
    $region27: #{critic_forward.1} parent=1 // pred_check_branch
      %40 = sbr.rel (0) target = $region29
    $region28: #{critic_forward.1} parent=1 // pred_region
      _
    $region29: #{critic_forward.1} parent=1 // pred_fallthru
      _
    // Predicated region
    $region30: #{critic_forward.1} parent=1 // pred_check
      _
    $region31: #{critic_forward.1} parent=1 // pred_check_branch
      %42 = sbr.rel (0) target = $region33
    $region32: #{critic_forward.1} parent=1 // pred_region
      _
    $region33: #{critic_forward.1} parent=1 // pred_fallthru
      _
    // Predicated region
    $region34: #{critic_forward.1} parent=1 // pred_check
      _
    $region35: #{critic_forward.1} parent=1 // pred_check_branch
      %44 = sbr.rel (0) target = $region37
    $region36: #{critic_forward.1} parent=1 // pred_region
      _
    $region37: #{critic_forward.1} parent=1 // pred_fallthru
      _
    // Predicated region
    $region38: #{critic_forward.1} parent=1 // pred_check
      _
    $region39: #{critic_forward.1} parent=1 // pred_check_branch
      %46 = sbr.rel (0) target = $region41
    $region40: #{critic_forward.1} parent=1 // pred_region
      %47 = dma.done [#allocation4], 512
    $region41: #{critic_forward.1} parent=1 // pred_fallthru
      _
    %v48 = vld [vmem:[%s0] sm:$0xff]
    %v49 = vld [vmem:[%s2] sm:$0xff]
    %v50 = vld [vmem:[%s2 + $0x8] sm:$0xf]
    %v51 = vld [vmem:[%s1] sm:$0xff]
    %v52 = vld [vmem:[%s3] sm:$0xf]
    %vm53 = vcmask 31744
    %v55 = vsel %vm53, %v51, 0
    %vm57 = vcmask 1043456
    %v59 = vsel %vm57, %v52, 0
    %61 = vmatprep.subr.mxu0 0.0
    %62 = vmatpush1.msra.mxu0 0.0
    %63 = vmatprep.subr.mxu0 0.0
    %64 = vmatpush1.msra.mxu0 0.0
    %65 = vmatprep.subr.mxu0 0.0
    %66 = vmatpush1.msra.mxu0 0.0
    %67 = vmatprep.subr.mxu0 0.0
    %68 = vmatpush1.msra.mxu0 0.0
    %69 = vmatprep.subr.mxu0 0.0
    %70 = vmatpush1.msra.mxu0 0.0
    %71 = vmatprep.subr.mxu0 0.0
    %72 = vmatpush1.msra.mxu0 0.0
    %73 = vmatprep.subr.mxu0 0.0
    %74 = vmatpush1.msra.mxu0 0.0
    %75 = vmatprep.subr.mxu0 0.0
    %76 = vmatpush1.msra.mxu0 0.0
    %77 = vmatprep.subr.mxu0 0.0
    %78 = vmatpush1.msra.mxu0 0.0
    %79 = vmatprep.subr.mxu0 0.0
    %80 = vmatpush1.msra.mxu0 0.0
    %81 = vmatprep.subr.mxu0 0.0
    %82 = vmatpush1.msra.mxu0 0.0
    %83 = vmatprep.subr.mxu0 0.0
    %84 = vmatpush1.msra.mxu0 0.0
    %85 = vmatprep.subr.mxu0 0.0
    %86 = vmatpush1.msra.mxu0 0.0
    %87 = vmatprep.subr.mxu0 0.0
    %88 = vmatpush1.msra.mxu0 0.0
    %89 = vmatprep.subr.mxu0 0.0
    %90 = vmatpush1.msra.mxu0 0.0
    %91 = vmatprep.subr.mxu0 0.0
    %92 = vmatpush1.msra.mxu0 %v59
    %93 = vmatprep.subr.mxu0 0.0
    %94 = vmatpush2.msra.mxu0 0.0
    %95 = vmatprep.subr.mxu0 0.0
    %96 = vmatpush2.msra.mxu0 0.0
    %97 = vmatprep.subr.mxu0 0.0
    %98 = vmatpush2.msra.mxu0 0.0
    %99 = vmatprep.subr.mxu0 0.0
    %100 = vmatpush2.msra.mxu0 0.0
    %101 = vmatprep.subr.mxu0 0.0
    %102 = vmatpush2.msra.mxu0 0.0
    %103 = vmatprep.subr.mxu0 0.0
    %104 = vmatpush2.msra.mxu0 0.0
    %105 = vmatprep.subr.mxu0 0.0
    %106 = vmatpush2.msra.mxu0 0.0
    %107 = vmatprep.subr.mxu0 0.0
    %108 = vmatpush2.msra.mxu0 0.0
    %109 = vmatprep.subr.mxu0 0.0
    %110 = vmatpush2.msra.mxu0 0.0
    %111 = vmatprep.subr.mxu0 0.0
    %112 = vmatpush2.msra.mxu0 0.0
    %113 = vmatprep.subr.mxu0 0.0
    %114 = vmatpush2.msra.mxu0 0.0
    %115 = vmatprep.subr.mxu0 0.0
    %116 = vmatpush2.msra.mxu0 0.0
    %117 = vmatprep.subr.mxu0 0.0
    %118 = vmatpush2.msra.mxu0 0.0
    %119 = vmatprep.subr.mxu0 0.0
    %120 = vmatpush2.msra.mxu0 0.0
    %121 = vmatprep.subr.mxu0 0.0
    %122 = vmatpush2.msra.mxu0 0.0
    %123 = vmatprep.subr.mxu0 0.0
    %124 = vmatpush2.msra.mxu0 0.0
    %125 = vmatprep.mubr.f32.mxu0 0.0
    %126 = vmatmul.mubr.f32.gmra.mxu0 %v55
    %v127 = vpop.f32.mrf.mxu0
    %v128 = vadd.f32 0.0, %v127
    %v129 = vpop.f32.mrf.mxu0
    %130 = vdwg.mxu0
    %vm131 = vcmask 97280
    %v133 = vsel %vm131, %v48, 0
    %v136 = vsel %vm57, %v50, 0
    %138 = vmatprep.subr.mxu0 0.0
    %139 = vmatpush1.msra.mxu0 0.0
    %140 = vmatprep.subr.mxu0 0.0
    %141 = vmatpush1.msra.mxu0 0.0
    %142 = vmatprep.subr.mxu0 0.0
    %143 = vmatpush1.msra.mxu0 0.0
    %144 = vmatprep.subr.mxu0 0.0
    %145 = vmatpush1.msra.mxu0 0.0
    %146 = vmatprep.subr.mxu0 0.0
    %147 = vmatpush1.msra.mxu0 0.0
    %148 = vmatprep.subr.mxu0 0.0
    %149 = vmatpush1.msra.mxu0 0.0
    %150 = vmatprep.subr.mxu0 0.0
    %151 = vmatpush1.msra.mxu0 0.0
    %152 = vmatprep.subr.mxu0 0.0
    %153 = vmatpush1.msra.mxu0 0.0
    %154 = vmatprep.subr.mxu0 0.0
    %155 = vmatpush1.msra.mxu0 0.0
    %156 = vmatprep.subr.mxu0 0.0
    %157 = vmatpush1.msra.mxu0 0.0
    %158 = vmatprep.subr.mxu0 0.0
    %159 = vmatpush1.msra.mxu0 0.0
    %160 = vmatprep.subr.mxu0 0.0
    %161 = vmatpush1.msra.mxu0 0.0
    %162 = vmatprep.subr.mxu0 0.0
    %163 = vmatpush1.msra.mxu0 0.0
    %164 = vmatprep.subr.mxu0 0.0
    %165 = vmatpush1.msra.mxu0 0.0
    %166 = vmatprep.subr.mxu0 0.0
    %167 = vmatpush1.msra.mxu0 %v136
    %168 = vmatprep.subr.mxu0 0.0
    %169 = vmatpush1.msra.mxu0 %v49
    %170 = vmatprep.subr.mxu0 0.0
    %171 = vmatpush2.msra.mxu0 0.0
    %172 = vmatprep.subr.mxu0 0.0
    %173 = vmatpush2.msra.mxu0 0.0
    %174 = vmatprep.subr.mxu0 0.0
    %175 = vmatpush2.msra.mxu0 0.0
    %176 = vmatprep.subr.mxu0 0.0
    %177 = vmatpush2.msra.mxu0 0.0
    %178 = vmatprep.subr.mxu0 0.0
    %179 = vmatpush2.msra.mxu0 0.0
    %180 = vmatprep.subr.mxu0 0.0
    %181 = vmatpush2.msra.mxu0 0.0
    %182 = vmatprep.subr.mxu0 0.0
    %183 = vmatpush2.msra.mxu0 0.0
    %184 = vmatprep.subr.mxu0 0.0
    %185 = vmatpush2.msra.mxu0 0.0
    %186 = vmatprep.subr.mxu0 0.0
    %187 = vmatpush2.msra.mxu0 0.0
    %188 = vmatprep.subr.mxu0 0.0
    %189 = vmatpush2.msra.mxu0 0.0
    %190 = vmatprep.subr.mxu0 0.0
    %191 = vmatpush2.msra.mxu0 0.0
    %192 = vmatprep.subr.mxu0 0.0
    %193 = vmatpush2.msra.mxu0 0.0
    %194 = vmatprep.subr.mxu0 0.0
    %195 = vmatpush2.msra.mxu0 0.0
    %196 = vmatprep.subr.mxu0 0.0
    %197 = vmatpush2.msra.mxu0 0.0
    %198 = vmatprep.subr.mxu0 0.0
    %199 = vmatpush2.msra.mxu0 0.0
    %200 = vmatprep.subr.mxu0 0.0
    %201 = vmatpush2.msra.mxu0 0.0
    %202 = vmatprep.mubr.f32.mxu0 0.0
    %203 = vmatmul.mubr.f32.gmra.mxu0 %v133
    %v204 = vpop.f32.mrf.mxu0
    %v205 = vadd.f32 %v128, %v204
    %v206 = vpop.f32.mrf.mxu0
    %207 = vdwg.mxu0
    %v208 = vld [vmem:[%s4] sm:$0x1]
    %v210 = vlaneseq
    %v211 = vshrl.u32 %v210, 7
    %v212 = vsub.s32 0, %v211
    %v213 = vrot.slane %v208, %v212
    %v215 = vadd.f32 %v205, %v213
    %v216 = vmax.f32 %v215, 0.0
    %v217 = vld [vmem:[#allocation3] sm:$0xff]
    %v218 = vld [vmem:[#allocation3 + $0x8] sm:$0xff]
    %v219 = vld [vmem:[#allocation3 + $0x10] sm:$0xff]
    %v220 = vld [vmem:[#allocation3 + $0x18] sm:$0xff]
    %v221 = vld [vmem:[%s6] sm:$0x1]
    %v223 = vlaneseq
    %v224 = vshrl.u32 %v223, 7
    %v225 = vsub.s32 0, %v224
    %v226 = vrot.slane %v221, %v225
    %vm228 = vcmask 261120
    %v230 = vsel %vm228, %v216, 0
    %232 = vmatprep.subr.mxu0 0.0
    %233 = vmatpush1.msra.mxu0 0.0
    %234 = vmatprep.subr.mxu0 0.0
    %235 = vmatpush1.msra.mxu0 0.0
    %236 = vmatprep.subr.mxu0 0.0
    %237 = vmatpush1.msra.mxu0 0.0
    %238 = vmatprep.subr.mxu0 0.0
    %239 = vmatpush1.msra.mxu0 0.0
    %240 = vmatprep.subr.mxu0 0.0
    %241 = vmatpush1.msra.mxu0 0.0
    %242 = vmatprep.subr.mxu0 0.0
    %243 = vmatpush1.msra.mxu0 0.0
    %244 = vmatprep.subr.mxu0 0.0
    %245 = vmatpush1.msra.mxu0 0.0
    %246 = vmatprep.subr.mxu0 0.0
    %247 = vmatpush1.msra.mxu0 0.0
    %248 = vmatprep.subr.mxu0 0.0
    %249 = vmatpush1.msra.mxu0 0.0
    %250 = vmatprep.subr.mxu0 0.0
    %251 = vmatpush1.msra.mxu0 0.0
    %252 = vmatprep.subr.mxu0 0.0
    %253 = vmatpush1.msra.mxu0 0.0
    %254 = vmatprep.subr.mxu0 0.0
    %255 = vmatpush1.msra.mxu0 0.0
    %256 = vmatprep.subr.mxu0 0.0
    %257 = vmatpush1.msra.mxu0 %v220
    %258 = vmatprep.subr.mxu0 0.0
    %259 = vmatpush1.msra.mxu0 %v219
    %260 = vmatprep.subr.mxu0 0.0
    %261 = vmatpush1.msra.mxu0 %v218
    %262 = vmatprep.subr.mxu0 0.0
    %263 = vmatpush1.msra.mxu0 %v217
    %264 = vmatprep.subr.mxu0 0.0
    %265 = vmatpush2.msra.mxu0 0.0
    %266 = vmatprep.subr.mxu0 0.0
    %267 = vmatpush2.msra.mxu0 0.0
    %268 = vmatprep.subr.mxu0 0.0
    %269 = vmatpush2.msra.mxu0 0.0
    %270 = vmatprep.subr.mxu0 0.0
    %271 = vmatpush2.msra.mxu0 0.0
    %272 = vmatprep.subr.mxu0 0.0
    %273 = vmatpush2.msra.mxu0 0.0
    %274 = vmatprep.subr.mxu0 0.0
    %275 = vmatpush2.msra.mxu0 0.0
    %276 = vmatprep.subr.mxu0 0.0
    %277 = vmatpush2.msra.mxu0 0.0
    %278 = vmatprep.subr.mxu0 0.0
    %279 = vmatpush2.msra.mxu0 0.0
    %280 = vmatprep.subr.mxu0 0.0
    %281 = vmatpush2.msra.mxu0 0.0
    %282 = vmatprep.subr.mxu0 0.0
    %283 = vmatpush2.msra.mxu0 0.0
    %284 = vmatprep.subr.mxu0 0.0
    %285 = vmatpush2.msra.mxu0 0.0
    %286 = vmatprep.subr.mxu0 0.0
    %287 = vmatpush2.msra.mxu0 0.0
    %288 = vmatprep.subr.mxu0 0.0
    %289 = vmatpush2.msra.mxu0 0.0
    %290 = vmatprep.subr.mxu0 0.0
    %291 = vmatpush2.msra.mxu0 0.0
    %292 = vmatprep.subr.mxu0 0.0
    %293 = vmatpush2.msra.mxu0 0.0
    %294 = vmatprep.subr.mxu0 0.0
    %295 = vmatpush2.msra.mxu0 0.0
    %296 = vmatprep.mubr.f32.mxu0 0.0
    %297 = vmatmul.mubr.f32.gmra.mxu0 %v230
    %v298 = vpop.f32.mrf.mxu0
    %v299 = vadd.f32 %v226, %v298
    %v300 = vpop.f32.mrf.mxu0
    %301 = vdwg.mxu0
    %v302 = vmax.f32 %v299, 0.0
    %v303 = vld [vmem:[%s7] sm:$0x1]
    %s304 = sld [smem:[#allocation2]]
    %v305 = vstv %s304
    %v307 = vsel %vm228, %v303, 0
    %v310 = vsel %vm228, %v302, 0
    %312 = vmatprep.subr.mxu0 0.0
    %313 = vmatpush1.xpose.msra.mxu0 0.0
    %314 = vmatprep.subr.mxu0 0.0
    %315 = vmatpush1.xpose.msra.mxu0 0.0
    %316 = vmatprep.subr.mxu0 0.0
    %317 = vmatpush1.xpose.msra.mxu0 0.0
    %318 = vmatprep.subr.mxu0 0.0
    %319 = vmatpush1.xpose.msra.mxu0 0.0
    %320 = vmatprep.subr.mxu0 0.0
    %321 = vmatpush1.xpose.msra.mxu0 0.0
    %322 = vmatprep.subr.mxu0 0.0
    %323 = vmatpush1.xpose.msra.mxu0 0.0
    %324 = vmatprep.subr.mxu0 0.0
    %325 = vmatpush1.xpose.msra.mxu0 0.0
    %326 = vmatprep.subr.mxu0 0.0
    %327 = vmatpush1.xpose.msra.mxu0 0.0
    %328 = vmatprep.subr.mxu0 0.0
    %329 = vmatpush1.xpose.msra.mxu0 0.0
    %330 = vmatprep.subr.mxu0 0.0
    %331 = vmatpush1.xpose.msra.mxu0 0.0
    %332 = vmatprep.subr.mxu0 0.0
    %333 = vmatpush1.xpose.msra.mxu0 0.0
    %334 = vmatprep.subr.mxu0 0.0
    %335 = vmatpush1.xpose.msra.mxu0 0.0
    %336 = vmatprep.subr.mxu0 0.0
    %337 = vmatpush1.xpose.msra.mxu0 0.0
    %338 = vmatprep.subr.mxu0 0.0
    %339 = vmatpush1.xpose.msra.mxu0 0.0
    %340 = vmatprep.subr.mxu0 0.0
    %341 = vmatpush1.xpose.msra.mxu0 0.0
    %342 = vmatprep.subr.mxu0 0.0
    %343 = vmatpush1.xpose.msra.mxu0 %v310
    %344 = vmatprep.subr.mxu0 0.0
    %345 = vmatpush2.xpose.msra.mxu0 0.0
    %346 = vmatprep.subr.mxu0 0.0
    %347 = vmatpush2.xpose.msra.mxu0 0.0
    %348 = vmatprep.subr.mxu0 0.0
    %349 = vmatpush2.xpose.msra.mxu0 0.0
    %350 = vmatprep.subr.mxu0 0.0
    %351 = vmatpush2.xpose.msra.mxu0 0.0
    %352 = vmatprep.subr.mxu0 0.0
    %353 = vmatpush2.xpose.msra.mxu0 0.0
    %354 = vmatprep.subr.mxu0 0.0
    %355 = vmatpush2.xpose.msra.mxu0 0.0
    %356 = vmatprep.subr.mxu0 0.0
    %357 = vmatpush2.xpose.msra.mxu0 0.0
    %358 = vmatprep.subr.mxu0 0.0
    %359 = vmatpush2.xpose.msra.mxu0 0.0
    %360 = vmatprep.subr.mxu0 0.0
    %361 = vmatpush2.xpose.msra.mxu0 0.0
    %362 = vmatprep.subr.mxu0 0.0
    %363 = vmatpush2.xpose.msra.mxu0 0.0
    %364 = vmatprep.subr.mxu0 0.0
    %365 = vmatpush2.xpose.msra.mxu0 0.0
    %366 = vmatprep.subr.mxu0 0.0
    %367 = vmatpush2.xpose.msra.mxu0 0.0
    %368 = vmatprep.subr.mxu0 0.0
    %369 = vmatpush2.xpose.msra.mxu0 0.0
    %370 = vmatprep.subr.mxu0 0.0
    %371 = vmatpush2.xpose.msra.mxu0 0.0
    %372 = vmatprep.subr.mxu0 0.0
    %373 = vmatpush2.xpose.msra.mxu0 0.0
    %374 = vmatprep.subr.mxu0 0.0
    %375 = vmatpush2.xpose.msra.mxu0 0.0
    %376 = vmatprep.mubr.f32.mxu0 0.0
    %377 = vmatmul.mubr.f32.gmra.mxu0 %v307
    %v378 = vpop.f32.mrf.mxu0
    %v379 = vadd.f32 %v305, %v378
    %v380 = vpop.f32.mrf.mxu0
    %381 = vdwg.mxu0
    %vm382 = vcmask 57344
    %383 = vst.msk [vmem:[#allocation6] sm:$0x1] %vm382, %v379
    // Predicated region
    $region42: #{critic_forward.1} parent=1 // pred_check
      _
    $region43: #{critic_forward.1} parent=1 // pred_check_branch
      %385 = sbr.rel (0) target = $region45
    $region44: #{critic_forward.1} parent=1 // pred_region
      %s387 = ssub.s32 16, 16
      %388 = vsyncadd [#allocation5], %s387
      %s390 = sshll.u32 [#allocation6], 4
      %s391 = int_to_ptr.vmem [resolvable:$true] %s390
      %393 = dma.vmem_to_hbm [thread:$0]  %s391, 16, %s9, [#allocation5]
    $region45: #{critic_forward.1} parent=1 // pred_fallthru
      _
    // Predicated region
    $region46: #{critic_forward.1} parent=1 // pred_check
      _
    $region47: #{critic_forward.1} parent=1 // pred_check_branch
      %395 = sbr.rel (0) target = $region49
    $region48: #{critic_forward.1} parent=1 // pred_region
      %396 = dma.done [#allocation5], 16
    $region49: #{critic_forward.1} parent=1 // pred_fallthru
      _
    %397 = vsyncpa [#allocation4], 1
    %398 = vsyncpa [#allocation5], 1

</llo_original>
